<compile_context>
chip_gen: v6e
topology: v6e:2x2x1
jax: 0.10.0
libtpu: 0.0.40
codegen_flags: <defaults>
</compile_context>

<pallas_src>
import jax
import jax.numpy as jnp
from jax.experimental import pallas as pl
from jax.experimental.pallas import tpu as pltpu


def _round_up(x: int, m: int) -> int:
    return ((x + m - 1) // m) * m


_COL_TILE_BYTES = 8192        # keep >= 8 KiB contiguous per row for DMA efficiency
_GATHER_MIN_CLASSES = 8192    # switch to the target-driven gather above this C


# --------------------------------------------------------------------------
# Scan path: tiled full read of log-probs (narrow / medium class counts).
# --------------------------------------------------------------------------
def _make_scan_kernel(n_rows: int, ignore_index: int):
    def kernel(logp_ref, tgt_ref, out_ref, sum_sc, cnt_sc):
        i = pl.program_id(0)          # row-tile index ('parallel')
        j = pl.program_id(1)          # class-tile index ('arbitrary' reduction)

        logp = logp_ref[...]          # (TN, TC) in native dtype (bf16 stays bf16)
        tgt = tgt_ref[...]            # (TN, 1) int32
        tn, tc = logp.shape

        # Shift the class-tile offset onto the (TN,1) target instead of adding
        # j*tc to the whole (TN,TC) iota: removes one full-tile VALU add/step.
        tgt_local = tgt - j * tc
        lane = jax.lax.broadcasted_iota(jnp.int32, (tn, tc), 1)
        pick = lane == tgt_local                                  # (TN, TC)

        # Select in native dtype; each row has at most one nonzero picked
        # element, so the lane reduce is exact even in bf16.  Cast only the
        # (TN,1) row sums to f32 (deferred-cast optimization for v6e/v7x).
        picked = jnp.where(pick, logp, jnp.zeros_like(logp))
        row_sum = jnp.sum(picked, axis=-1, keepdims=True).astype(jnp.float32)

        row = jax.lax.broadcasted_iota(jnp.int32, (tn, 1), 0) + i * tn
        row_valid = jnp.logical_and(row < n_rows, tgt != ignore_index)

        @pl.when(j == 0)
        def _init():
            sum_sc[0] = jnp.float32(0.0)
            cnt_sc[0] = jnp.sum(row_valid.astype(jnp.float32))

        sum_sc[0] = sum_sc[0] + jnp.sum(
            jnp.where(row_valid, row_sum, jnp.float32(0.0)))

        @pl.when(j == pl.num_programs(1) - 1)
        def _emit():
            lane_o = jax.lax.broadcasted_iota(jnp.int32, (1, 1, 128), 2)
            out_ref[...] = jnp.where(
                lane_o == 0, sum_sc[0],
                jnp.where(lane_o == 1, cnt_sc[0], jnp.float32(0.0)))

    return kernel


def _nll_loss_scan(output, target, *, ignore_index, row_tile, col_tile,
                   tile_budget_bytes):
    n, c = output.shape
    itemsize = jnp.dtype(output.dtype).itemsize

    if col_tile is None:
        # Full class dim when narrow, else a lane-dense dtype-aware tile
        # (2048 lanes f32, 4096 lanes bf16 -> 8 KiB contiguous per row).
        max_col = max(128, _COL_TILE_BYTES // itemsize)
        col_tile = c if c <= max_col else max_col
    if row_tile is None:
        # Largest row tile inside the budget; double-buffered logp tiles stay
        # <= 2 * tile_budget_bytes, which fits the 32 MiB scoped VMEM limit
        # on v5e/v6e/v7x with the 8 MiB default.
        rows = max(8, tile_budget_bytes // max(1, col_tile * itemsize))
        row_tile = max(8, min((rows // 8) * 8, _round_up(n, 8)))

    grid = (pl.cdiv(n, row_tile), pl.cdiv(c, col_tile))
    tgt2d = target.astype(jnp.int32).reshape(n, 1)

    partials = pl.pallas_call(
        _make_scan_kernel(n_rows=n, ignore_index=ignore_index),
        out_shape=jax.ShapeDtypeStruct((grid[0], 1, 128), jnp.float32),
        grid=grid,
        in_specs=[
            pl.BlockSpec((row_tile, col_tile), lambda i, j: (i, j)),
            pl.BlockSpec((row_tile, 1), lambda i, j: (i, 0)),
        ],
        out_specs=pl.BlockSpec((1, 1, 128), lambda i, j: (i, 0, 0)),
        scratch_shapes=[pltpu.SMEM((1,), jnp.float32),   # row-tile partial sum
                        pltpu.SMEM((1,), jnp.float32)],  # row-tile valid count
        compiler_params=pltpu.CompilerParams(
            dimension_semantics=("parallel", "arbitrary"),
            vmem_limit_bytes=32 * 1024 * 1024),
    )(output, tgt2d)

    sums = partials[:, 0, 0]
    cnts = partials[:, 0, 1]
    # NaN when every target is ignored (0/0) -- matches torch mean reduction.
    return -jnp.sum(sums) / jnp.sum(cnts)


# --------------------------------------------------------------------------
# Gather path: per-row DMA of only the 128-lane class block holding target[i].
# --------------------------------------------------------------------------
def _make_gather_kernel(n_rows: int, n_col_blocks: int, ignore_index: int,
                        row_tile: int):
    n_classes = n_col_blocks * 128

    def kernel(tgt_smem, logp_hbm, out_ref, buf, sem, sum_sc, cnt_sc):
        # tgt_smem : (N,) int32 in SMEM (scalar prefetch)
        # logp_hbm : (N * n_col_blocks, 128) log-probs left in HBM
        # out_ref  : (1, 1, 128) per-row-tile partial tile
        # buf      : (2, 1, 128) double-buffered gather landing zone
        i = pl.program_id(0)
        base = i * row_tile
        n_local = jnp.minimum(row_tile, n_rows - base)

        def fetch(l, slot):
            row_g = base + l
            t = tgt_smem[row_g]
            t_safe = jnp.clip(jnp.where(t == ignore_index, 0, t),
                              0, n_classes - 1)
            blk = t_safe // 128
            idx = row_g * n_col_blocks + blk
            pltpu.make_async_copy(logp_hbm.at[pl.ds(idx, 1)],
                                  buf.at[slot], sem.at[slot]).start()

        fetch(0, 0)
        sum_sc[0] = jnp.float32(0.0)
        cnt_sc[0] = jnp.float32(0.0)

        @pl.loop(0, n_local)
        def _(l):
            slot = l & 1
            # Wait the in-flight copy for this row (shape-matched descriptor).
            pltpu.make_async_copy(logp_hbm.at[pl.ds(0, 1)],
                                  buf.at[slot], sem.at[slot]).wait()

            @pl.when(l + 1 < n_local)
            def _prefetch():
                fetch(l + 1, 1 - slot)

            t = tgt_smem[base + l]
            valid = t != ignore_index
            lane_off = jnp.where(valid, t, 0) % 128
            lane = jax.lax.broadcasted_iota(jnp.int32, (1, 128), 1)
            v = buf[slot].astype(jnp.float32)                 # (1, 128)
            picked = jnp.sum(jnp.where(lane == lane_off, v, jnp.float32(0.0)))
            sum_sc[0] = sum_sc[0] + jnp.where(valid, picked, jnp.float32(0.0))
            cnt_sc[0] = cnt_sc[0] + jnp.where(valid, jnp.float32(1.0),
                                              jnp.float32(0.0))

        lane_o = jax.lax.broadcasted_iota(jnp.int32, (1, 1, 128), 2)
        out_ref[...] = jnp.where(
            lane_o == 0, sum_sc[0],
            jnp.where(lane_o == 1, cnt_sc[0], jnp.float32(0.0)))

    return kernel


def _nll_loss_gather(output, target, *, ignore_index, row_tile):
    n, c = output.shape
    assert c % 128 == 0, "gather path requires C % 128 == 0"
    nb = c // 128
    logp2 = output.reshape(n * nb, 128)       # contiguous; free reshape
    tgt = target.astype(jnp.int32)
    grid0 = pl.cdiv(n, row_tile)

    partials = pl.pallas_call(
        _make_gather_kernel(n, nb, ignore_index, row_tile),
        out_shape=jax.ShapeDtypeStruct((grid0, 1, 128), jnp.float32),
        grid_spec=pltpu.PrefetchScalarGridSpec(
            num_scalar_prefetch=1,
            grid=(grid0,),
            in_specs=[pl.BlockSpec(memory_space=pl.ANY)],
            out_specs=pl.BlockSpec((1, 1, 128), lambda i, tgt_ref: (i, 0, 0)),
            scratch_shapes=[pltpu.VMEM((2, 1, 128), output.dtype),
                            pltpu.SemaphoreType.DMA((2,)),
                            pltpu.SMEM((1,), jnp.float32),
                            pltpu.SMEM((1,), jnp.float32)]),
        compiler_params=pltpu.CompilerParams(
            dimension_semantics=("parallel",),
            vmem_limit_bytes=32 * 1024 * 1024),
    )(tgt, logp2)

    sums = partials[:, 0, 0]
    cnts = partials[:, 0, 1]
    return -jnp.sum(sums) / jnp.sum(cnts)


# --------------------------------------------------------------------------
# Public entry point (mirrors F.nll_loss(output, target) defaults).
# --------------------------------------------------------------------------
def nll_loss(output: jax.Array, target: jax.Array, *,
             ignore_index: int = -100,
             row_tile: int | None = None,
             col_tile: int | None = None,
             tile_budget_bytes: int = 8 << 20,
             use_gather: bool | None = None) -> jax.Array:
    """Pallas equivalent of torch.nn.functional.nll_loss(output, target)."""
    n, c = output.shape
    if use_gather is None:
        use_gather = (c >= _GATHER_MIN_CLASSES) and (c % 128 == 0)
    if use_gather and (c % 128 == 0):
        return _nll_loss_gather(output, target, ignore_index=ignore_index,
                                row_tile=row_tile if row_tile else 512)
    return _nll_loss_scan(output, target, ignore_index=ignore_index,
                          row_tile=row_tile, col_tile=col_tile,
                          tile_budget_bytes=tile_budget_bytes)


if __name__ == "__main__":
    key = jax.random.PRNGKey(0)
    k1, k2, k3, k4 = jax.random.split(key, 4)

    def ref_nll(logp, tgt, ignore_index=-100):
        valid = tgt != ignore_index
        safe = jnp.where(valid, tgt, 0)
        vals = jnp.take_along_axis(logp.astype(jnp.float32),
                                   safe[:, None], axis=1)[:, 0]
        return -jnp.sum(jnp.where(valid, vals, 0.0)) / jnp.sum(valid)

    # Small shapes consistent with the module: batch=24, classes=32.
    N, C = 24, 32
    logits = jax.random.normal(k1, (N, C), dtype=jnp.float32)
    log_probs = jax.nn.log_softmax(logits, axis=-1)   # nll_loss expects log-probs
    target = jax.random.randint(k2, (N,), 0, C, dtype=jnp.int32)
    target = target.at[3].set(-100)                   # exercise ignore_index
    ref = ref_nll(log_probs, target)

    # 1) multi row-tile scan path (grid = (3, 1))
    loss = nll_loss(log_probs, target, row_tile=8)
    jax.block_until_ready(loss)
    assert jnp.allclose(loss, ref, atol=1e-5, rtol=1e-5), (loss, ref)

    # 2) auto tile sizing (grid = (1, 1))
    loss_auto = nll_loss(log_probs, target)
    jax.block_until_ready(loss_auto)
    assert jnp.allclose(loss_auto, ref, atol=1e-5, rtol=1e-5), (loss_auto, ref)

    # 3) native bf16 input (select/reduce in bf16, cast deferred to row sums)
    lp_bf16 = log_probs.astype(jnp.bfloat16)
    ref_bf = ref_nll(lp_bf16, target)
    loss_bf = nll_loss(lp_bf16, target, row_tile=8)
    jax.block_until_ready(loss_bf)
    assert jnp.allclose(loss_bf, ref_bf, atol=1e-2, rtol=1e-2), (loss_bf, ref_bf)

    # 4) wider class dim: exercise the column sweep (grid = (3, 2)) and the
    #    target-driven gather path on the same data.
    N2, C2 = 24, 256
    logits2 = jax.random.normal(k3, (N2, C2), dtype=jnp.float32)
    log_probs2 = jax.nn.log_softmax(logits2, axis=-1)
    target2 = jax.random.randint(k4, (N2,), 0, C2, dtype=jnp.int32)
    target2 = target2.at[0].set(-100)
    ref2 = ref_nll(log_probs2, target2)

    loss_cols = nll_loss(log_probs2, target2, row_tile=8, col_tile=128)
    jax.block_until_ready(loss_cols)
    assert jnp.allclose(loss_cols, ref2, atol=1e-5, rtol=1e-5), (loss_cols, ref2)

    loss_gather = nll_loss(log_probs2, target2, use_gather=True)
    jax.block_until_ready(loss_gather)
    assert jnp.allclose(loss_gather, ref2, atol=1e-5, rtol=1e-5), (loss_gather, ref2)

    print("KERNEL_OK")
</pallas_src>

<mosaic_0001>
module attributes {stable_mosaic.version = 11 : i64} {
  func.func @kernel(%arg0: i32, %arg1: i32, %arg2: memref<8x32xf32, #tpu.memory_space<vmem>>, %arg3: memref<8x1xi32, #tpu.memory_space<vmem>>, %arg4: memref<1x1x128xf32, #tpu.memory_space<vmem>>, %arg5: memref<1xf32, #tpu.memory_space<smem>>, %arg6: memref<1xf32, #tpu.memory_space<smem>>) attributes {dimension_semantics = [#tpu.dimension_semantics<parallel>, #tpu.dimension_semantics<arbitrary>], iteration_bounds = array<i64: 3, 1>, scalar_prefetch = 0 : i64, scratch_operands = 2 : i64, tpu.core_type = #tpu.core_type<tc>, window_params = [{transform_indices = @transform_0, window_bounds = array<i64: 8, 32>}, {transform_indices = @transform_1, window_bounds = array<i64: 8, 1>}, {transform_indices = @transform_2, window_bounds = array<i64: 1, 1, 128>}]} {
    %c0 = arith.constant 0 : index
    %c0_0 = arith.constant 0 : index
    %0 = vector.load %arg2[%c0, %c0_0] : memref<8x32xf32, #tpu.memory_space<vmem>>, vector<8x32xf32>
    %c0_1 = arith.constant 0 : index
    %c0_2 = arith.constant 0 : index
    %1 = vector.load %arg3[%c0_1, %c0_2] : memref<8x1xi32, #tpu.memory_space<vmem>>, vector<8x1xi32>
    %c32_i32 = arith.constant 32 : i32
    %2 = arith.muli %arg1, %c32_i32 : i32
    %3 = vector.broadcast %2 : i32 to vector<8x1xi32>
    %4 = arith.subi %1, %3 : vector<8x1xi32>
    %5 = tpu.iota {dimensions = array<i32: 1>} : vector<8x32xi32>
    %6 = vector.broadcast %4 : vector<8x1xi32> to vector<8x32xi32>
    %7 = arith.cmpi eq, %5, %6 : vector<8x32xi32>
    %cst = arith.constant 0.000000e+00 : f32
    %8 = vector.broadcast %cst : f32 to vector<8x32xf32>
    %9 = arith.select %7, %0, %8 : vector<8x32xi1>, vector<8x32xf32>
    %cst_3 = arith.constant dense<0.000000e+00> : vector<8xf32>
    %10 = vector.multi_reduction <add>, %9, %cst_3 [1] : vector<8x32xf32> to vector<8xf32>
    %11 = vector.shape_cast %10 : vector<8xf32> to vector<8x1xf32>
    %12 = tpu.iota {dimensions = array<i32: 0>} : vector<8x1xi32>
    %c8_i32 = arith.constant 8 : i32
    %13 = arith.muli %arg0, %c8_i32 : i32
    %14 = vector.broadcast %13 : i32 to vector<8x1xi32>
    %15 = arith.addi %12, %14 : vector<8x1xi32>
    %c24_i32 = arith.constant 24 : i32
    %16 = vector.broadcast %c24_i32 : i32 to vector<8x1xi32>
    %17 = arith.cmpi slt, %15, %16 : vector<8x1xi32>
    %c-100_i32 = arith.constant -100 : i32
    %18 = vector.broadcast %c-100_i32 : i32 to vector<8x1xi32>
    %19 = arith.cmpi ne, %1, %18 : vector<8x1xi32>
    %20 = arith.andi %17, %19 : vector<8x1xi1>
    %c0_i32 = arith.constant 0 : i32
    %21 = arith.cmpi eq, %arg1, %c0_i32 : i32
    %22 = arith.extui %21 : i1 to i32
    %c0_i32_4 = arith.constant 0 : i32
    %23 = arith.cmpi ne, %22, %c0_i32_4 : i32
    scf.if %23 {
      %cst_11 = arith.constant 0.000000e+00 : f32
      %c0_12 = arith.constant 0 : index
      %36 = memref.load %arg5[%c0_12] : memref<1xf32, #tpu.memory_space<smem>>
      memref.store %cst_11, %arg5[%c0_12] : memref<1xf32, #tpu.memory_space<smem>>
      %37 = arith.extui %20 : vector<8x1xi1> to vector<8x1xi32>
      %38 = arith.sitofp %37 : vector<8x1xi32> to vector<8x1xf32>
      %39 = vector.shape_cast %38 : vector<8x1xf32> to vector<1x8x1xf32>
      %cst_13 = arith.constant dense<0.000000e+00> : vector<1xf32>
      %40 = vector.multi_reduction <add>, %39, %cst_13 [1, 2] : vector<1x8x1xf32> to vector<1xf32>
      %41 = vector.shape_cast %40 : vector<1xf32> to vector<1x1x1xf32>
      %42 = vector.extract %41[0, 0, 0] : f32 from vector<1x1x1xf32>
      %c0_14 = arith.constant 0 : index
      %43 = memref.load %arg6[%c0_14] : memref<1xf32, #tpu.memory_space<smem>>
      memref.store %42, %arg6[%c0_14] : memref<1xf32, #tpu.memory_space<smem>>
    } else {
    }
    %c0_5 = arith.constant 0 : index
    %24 = memref.load %arg5[%c0_5] : memref<1xf32, #tpu.memory_space<smem>>
    %cst_6 = arith.constant 0.000000e+00 : f32
    %25 = vector.broadcast %cst_6 : f32 to vector<8x1xf32>
    %26 = arith.select %20, %11, %25 : vector<8x1xi1>, vector<8x1xf32>
    %27 = vector.shape_cast %26 : vector<8x1xf32> to vector<1x8x1xf32>
    %cst_7 = arith.constant dense<0.000000e+00> : vector<1xf32>
    %28 = vector.multi_reduction <add>, %27, %cst_7 [1, 2] : vector<1x8x1xf32> to vector<1xf32>
    %29 = vector.shape_cast %28 : vector<1xf32> to vector<1x1x1xf32>
    %30 = vector.extract %29[0, 0, 0] : f32 from vector<1x1x1xf32>
    %31 = arith.addf %24, %30 : f32
    %c0_8 = arith.constant 0 : index
    %32 = memref.load %arg5[%c0_8] : memref<1xf32, #tpu.memory_space<smem>>
    memref.store %31, %arg5[%c0_8] : memref<1xf32, #tpu.memory_space<smem>>
    %c0_i32_9 = arith.constant 0 : i32
    %33 = arith.cmpi eq, %arg1, %c0_i32_9 : i32
    %34 = arith.extui %33 : i1 to i32
    %c0_i32_10 = arith.constant 0 : i32
    %35 = arith.cmpi ne, %34, %c0_i32_10 : i32
    scf.if %35 {
      %36 = tpu.iota {dimensions = array<i32: 2>} : vector<1x1x128xi32>
      %c0_i32_11 = arith.constant 0 : i32
      %37 = vector.broadcast %c0_i32_11 : i32 to vector<1x1x128xi32>
      %38 = arith.cmpi eq, %36, %37 : vector<1x1x128xi32>
      %c0_12 = arith.constant 0 : index
      %39 = memref.load %arg5[%c0_12] : memref<1xf32, #tpu.memory_space<smem>>
      %c1_i32 = arith.constant 1 : i32
      %40 = vector.broadcast %c1_i32 : i32 to vector<1x1x128xi32>
      %41 = arith.cmpi eq, %36, %40 : vector<1x1x128xi32>
      %c0_13 = arith.constant 0 : index
      %42 = memref.load %arg6[%c0_13] : memref<1xf32, #tpu.memory_space<smem>>
      %cst_14 = arith.constant 0.000000e+00 : f32
      %43 = vector.broadcast %42 : f32 to vector<1x1x128xf32>
      %44 = vector.broadcast %cst_14 : f32 to vector<1x1x128xf32>
      %45 = arith.select %41, %43, %44 : vector<1x1x128xi1>, vector<1x1x128xf32>
      %46 = vector.broadcast %39 : f32 to vector<1x1x128xf32>
      %47 = arith.select %38, %46, %45 : vector<1x1x128xi1>, vector<1x1x128xf32>
      %c0_15 = arith.constant 0 : index
      %c0_16 = arith.constant 0 : index
      %c0_17 = arith.constant 0 : index
      %48 = vector.load %arg4[%c0_15, %c0_16, %c0_17] : memref<1x1x128xf32, #tpu.memory_space<vmem>>, vector<1x1x128xf32>
      tpu.vector_store %arg4[%c0_15, %c0_16, %c0_17], %47 {strides = array<i32>} : memref<1x1x128xf32, #tpu.memory_space<vmem>>, vector<1x1x128xf32>,
    } else {
    }
    return
  }
  func.func @transform_0(%arg0: i32, %arg1: i32) -> (i32, i32) {
    %c0_i32 = arith.constant 0 : i32
    return %arg0, %arg1 : i32, i32
  }
  func.func @transform_1(%arg0: i32, %arg1: i32) -> (i32, i32) {
    %c0_i32 = arith.constant 0 : i32
    %c0_i32_0 = arith.constant 0 : i32
    return %arg0, %c0_i32 : i32, i32
  }
  func.func @transform_2(%arg0: i32, %arg1: i32) -> (i32, i32, i32) {
    %c0_i32 = arith.constant 0 : i32
    %c0_i32_0 = arith.constant 0 : i32
    %c0_i32_1 = arith.constant 0 : i32
    return %arg0, %c0_i32, %c0_i32_0 : i32, i32, i32
  }
}

</mosaic_0001>

<llo_original>
// kernel: tpu_custom_call.1
$region0: #{tpu_custom_call.1}
  #allocation0 [shape = 'u32[]', space=smem, size = 0x4, offset = 0x4, fixed_abs, tag = 'smem constant byte address 0x4 - core index']
  #allocation1 [shape = 'u32[144,128]{1,0:T(1,128)}', space=vmem, size = 0x12000, scoped, tag = 'internal scratch']
  #allocation2 [shape = 'f32[1]{0:T(128)}', space=smem, size = 0x200, scoped, tag = 'scratch operand']
  #allocation3 [shape = 'f32[1]{0:T(128)}', space=smem, size = 0x200, scoped, tag = 'scratch operand']
  %s0 = inlined_call_operand.vmem [shape: f32[24,32], index: 0, kind: input, shape index: {}]
  %s1 = inlined_call_operand.vmem [shape: s32[24,1], index: 1, kind: input, shape index: {}]
  %s2 = inlined_call_operand.hbm [shape: f32[3,1,128], index: 2, kind: output, shape index: {}]
  %s3 = sld [smem:[#allocation0]]
  $region49: #{tpu_custom_call.1} parent=0
    _
  %s5 = ssub.s32 1, %s3
  %s6 = scalar_select 0, %s5, %s3
  $region1: #{tpu_custom_call.1} parent=0
    #allocation4 [shape = 'u8[1024]{0}', space=vmem, size = 0x400, scoped, tag = 'output window, operand 0']
    #allocation5 [shape = 's32[2]{0}', space=sflag, size = 0x8, scoped, tag = 'scoped memory for tpu_custom_call.1']
    %7 = vsyncpa [#allocation5], 0
    %s8 = scalar_lea.sflag [#allocation5], 1
    %9 = vsyncpa %s8, 0
    loop: start=0, step=1, limit=5
    $region2: #{tpu_custom_call.1} parent=1 // loop_pre_header
      _
    $region3: #{tpu_custom_call.1} parent=1 // loop_header
      %s11 = sphi 0, %s15
      %p12 = scmp.ge.s32.totalorder %s11, 5
      %s18 = sphi 0, %s30
      %s19 = sphi 0, %s26
      %s20 = sphi 0, %s18
      %s21 = sphi 0, %s19
      %s22 = sphi 0, %s20
      %s23 = sphi 0, %s21
      %s35 = sphi 0, %s37
      %s38 = sphi 0, %s35
      %s39 = sphi 0, %s38
      %s55 = sphi 0, %s39
      %s61 = sphi 0, %s63
      %s64 = sphi 0, %s61
      %s65 = sphi 0, %s64
      %s81 = sphi 0, %s65
      %s87 = sphi 0, %s89
      %s90 = sphi 0, %s87
      %s91 = sphi 0, %s90
      %s107 = sphi 0, %s91
    $region4: #{tpu_custom_call.1} parent=1 // loop_header_branch
      %14 = sbr.rel (%p12) target = $region8
    $region5: #{tpu_custom_call.1} parent=1 // loop_body
      %s16 = ssub.s32 %s11, 1
      %s17 = ssub.s32 %s11, 2
      %s24 = sadd.s32 1, %s19
      %p25 = scmp.ge.s32.totalorder %s24, 1
      %s26 = scalar_select %p25, 0, %s24
      %s27 = sadd.s32 1, %s18
      %s28 = scalar_select %p25, %s27, %s18
      %p29 = scmp.ge.s32.totalorder %s28, 3
      %s30 = scalar_select %p29, 0, %s28
      %s31 = ssub.s32 %s18, %s30
      %s32 = ssub.s32 %s19, %s26
      %s33 = sor.u32 %s31, %s32
      %p34 = scmp.eq.s32.totalorder %s33, 0
      %s36 = sadd.s32 %s35, 1
      %s37 = scalar_select %p34, %s35, %s36
      %p40 = pneg %p34
      %p41 = scmp.eq.s32.totalorder %s11, 2
      %p42 = por %p40, %p41
      %p43 = scmp.ne.s32.totalorder %s35, %s38
      %p44 = scmp.eq.s32.totalorder %s11, 0
      %p45 = por %p43, %p44
      %p46 = scmp.ne.s32.totalorder %s35, %s38
      %p47 = scmp.eq.s32.totalorder %s16, 2
      %p48 = por %p46, %p47
      %p49 = scmp.ne.s32.totalorder %s38, %s39
      %p50 = scmp.eq.s32.totalorder %s16, 0
      %p51 = por %p49, %p50
      %p52 = scmp.ne.s32.totalorder %s38, %s39
      %p53 = scmp.eq.s32.totalorder %s17, 2
      %p54 = por %p52, %p53
      %p56 = scmp.ne.s32.totalorder %s39, %s55
      %p57 = scmp.eq.s32.totalorder %s17, 0
      %p58 = por %p56, %p57
      %s59 = ssub.s32 %s18, %s30
      %p60 = scmp.eq.s32.totalorder %s59, 0
      %s62 = sadd.s32 %s61, 1
      %s63 = scalar_select %p60, %s61, %s62
      %p66 = pneg %p60
      %p67 = scmp.eq.s32.totalorder %s11, 2
      %p68 = por %p66, %p67
      %p69 = scmp.ne.s32.totalorder %s61, %s64
      %p70 = scmp.eq.s32.totalorder %s11, 0
      %p71 = por %p69, %p70
      %p72 = scmp.ne.s32.totalorder %s61, %s64
      %p73 = scmp.eq.s32.totalorder %s16, 2
      %p74 = por %p72, %p73
      %p75 = scmp.ne.s32.totalorder %s64, %s65
      %p76 = scmp.eq.s32.totalorder %s16, 0
      %p77 = por %p75, %p76
      %p78 = scmp.ne.s32.totalorder %s64, %s65
      %p79 = scmp.eq.s32.totalorder %s17, 2
      %p80 = por %p78, %p79
      %p82 = scmp.ne.s32.totalorder %s65, %s81
      %p83 = scmp.eq.s32.totalorder %s17, 0
      %p84 = por %p82, %p83
      %s85 = ssub.s32 %s18, %s30
      %p86 = scmp.eq.s32.totalorder %s85, 0
      %s88 = sadd.s32 %s87, 1
      %s89 = scalar_select %p86, %s87, %s88
      %p92 = pneg %p86
      %p93 = scmp.eq.s32.totalorder %s11, 2
      %p94 = por %p92, %p93
      %p95 = scmp.ne.s32.totalorder %s87, %s90
      %p96 = scmp.eq.s32.totalorder %s11, 0
      %p97 = por %p95, %p96
      %p98 = scmp.ne.s32.totalorder %s87, %s90
      %p99 = scmp.eq.s32.totalorder %s16, 2
      %p100 = por %p98, %p99
      %p101 = scmp.ne.s32.totalorder %s90, %s91
      %p102 = scmp.eq.s32.totalorder %s16, 0
      %p103 = por %p101, %p102
      %p104 = scmp.ne.s32.totalorder %s90, %s91
      %p105 = scmp.eq.s32.totalorder %s17, 2
      %p106 = por %p104, %p105
      %p108 = scmp.ne.s32.totalorder %s91, %s107
      %p109 = scmp.eq.s32.totalorder %s17, 0
      %p110 = por %p108, %p109
      %p111 = scmp.le.s32.totalorder 1, %s11
      %p112 = scmp.lt.s32.totalorder %s11, 4
      %p113 = pnand %p111, %p112
      %p114 = pneg %p113
      // Predicated region
      $region9: #{tpu_custom_call.1} parent=5 // pred_check
        _
      $region10: #{tpu_custom_call.1} parent=5 // pred_check_branch
        %116 = sbr.rel (%p113) target = $region12
      $region11: #{tpu_custom_call.1} parent=5 // pred_region
        %s117 = ssub.s32 %s11, 1
      $region12: #{tpu_custom_call.1} parent=5 // pred_fallthru
        _
      %p118 = scmp.lt.s32.totalorder %s11, 3
      // Predicated region
      $region13: #{tpu_custom_call.1} parent=5 // pred_check
        %p119 = pneg %p118
      $region14: #{tpu_custom_call.1} parent=5 // pred_check_branch
        %121 = sbr.rel (%p119) target = $region16
      $region15: #{tpu_custom_call.1} parent=5 // pred_region
        // Predicated region
        $region17: #{tpu_custom_call.1} parent=15 // pred_check
          %p122 = pneg %p45
        $region18: #{tpu_custom_call.1} parent=15 // pred_check_branch
          %124 = sbr.rel (%p122) target = $region20
        $region19: #{tpu_custom_call.1} parent=15 // pred_region
          %p125 = scmp.lt.s32.totalorder %s18, 2
          %s126 = scalar_select %p125, %s18, 2
          %p127 = scmp.lt.s32.totalorder %s19, 0
          %s128 = scalar_select %p127, %s19, 0
          %s129 = sadd.s32 %s128, %s126
          %s130 = smul.addr %s129, 8
          %s131 = scalar_lea.vmem %s0, %s130
        $region20: #{tpu_custom_call.1} parent=15 // pred_fallthru
          _
        // Predicated region
        $region21: #{tpu_custom_call.1} parent=15 // pred_check
          %p132 = pneg %p71
        $region22: #{tpu_custom_call.1} parent=15 // pred_check_branch
          %134 = sbr.rel (%p132) target = $region24
        $region23: #{tpu_custom_call.1} parent=15 // pred_region
          %p135 = scmp.lt.s32.totalorder %s18, 2
          %s136 = scalar_select %p135, %s18, 2
          %s137 = smul.addr %s136, 8
          %s138 = scalar_lea.vmem %s1, %s137
        $region24: #{tpu_custom_call.1} parent=15 // pred_fallthru
          _
      $region16: #{tpu_custom_call.1} parent=5 // pred_fallthru
        _
      %p139 = scmp.le.s32.totalorder 1, %s11
      %p140 = scmp.lt.s32.totalorder %s11, 4
      %p141 = pnand %p139, %p140
      %p142 = pneg %p141
      // Predicated region
      $region25: #{tpu_custom_call.1} parent=5 // pred_check
        _
      $region26: #{tpu_custom_call.1} parent=5 // pred_check_branch
        %144 = sbr.rel (%p141) target = $region28
      $region27: #{tpu_custom_call.1} parent=5 // pred_region
        %s145 = ssub.s32 %s11, 1
        %p146 = scmp.lt.s32.totalorder %s20, 2
        %s147 = scalar_select %p146, %s20, 2
        %p148 = scmp.lt.s32.totalorder %s21, 0
        %s149 = scalar_select %p148, %s21, 0
        %s150 = sadd.s32 %s149, %s147
        %s151 = smul.addr %s150, 8
        %s152 = scalar_lea.vmem %s0, %s151
        %p153 = pneg %p51
        %p154 = pneg %p48
        %p155 = scmp.lt.s32.totalorder %s20, 2
        %s156 = scalar_select %p155, %s20, 2
        %s157 = smul.addr %s156, 8
        %s158 = scalar_lea.vmem %s1, %s157
        %p159 = pneg %p77
        %p160 = pneg %p74
        %p161 = pneg %p103
        %p162 = pneg %p100
        %s163 = sand.u32 %s90, 1
        %s164 = scalar_lea.sflag [#allocation5], %s163
        %s165 = sand.u32 %s90, 1
        %s166 = scalar_lea.vmem [#allocation4], %s165
        %p167 = scmp.lt.s32.totalorder %s20, 2
        %s168 = scalar_select %p167, %s20, 2
        %p169 = scmp.lt.s32.totalorder %s21, 0
        %s170 = scalar_select %p169, %s21, 0
        %s171 = sadd.s32 %s170, %s168
        %s172 = smul.addr %s171, 8
        %s173 = scalar_lea.vmem %s0, %s172
        %p174 = scmp.lt.s32.totalorder %s20, 2
        %s175 = scalar_select %p174, %s20, 2
        %s176 = smul.addr %s175, 8
        %s177 = scalar_lea.vmem %s1, %s176
        %v178 = vld [vmem:[%s173] sm:$0xff]
        %v179 = vld [vmem:[%s177] sm:$0xff]
        %s180 = smul.u32 %s21, 32
        %v181 = vstv %s180
        %v182 = vsub.s32 %v179, %v181
        %v183 = vlaneseq
        %v184 = vand.u32 %v183, 127
        %185 = vset.pattern.permute.xlu0 0
        %186 = vperm.xlu0 %185, %v182
        %v187 = vpop.permute.xlu0 %186
        %vm188 = vcmp.eq.s32.totalorder %v184, %v187
        %v189 = vsel %vm188, %v178, 0.0
        %vm190 = vcmask 261120
        %v191 = vsel %vm190, %v189, 0.0
        %192 = vadd.xlane.f32.xlu0 %v191
        %v193 = vpop.xlane.xlu0 %192
        %v194 = vlaneseq
        %v195 = vshrl.u32 %v194, 7
        %s196 = smul.u32 %s20, 8
        %v197 = vstv %s196
        %v198 = vadd.s32 %v195, %v197
        %vm199 = vcmp.lt.s32.totalorder %v198, 24
        %vm200 = vcmp.ne.s32.totalorder %v179, 4294967196
        %vm201 = vmand %vm199, %vm200
        %p202 = scmp.eq.s32.totalorder %s21, 0
        // Predicated region
        $region29: #{tpu_custom_call.1} parent=27 // pred_check
          %p203 = pneg %p202
        $region30: #{tpu_custom_call.1} parent=27 // pred_check_branch
          %205 = sbr.rel (%p203) target = $region32
        $region31: #{tpu_custom_call.1} parent=27 // pred_region
          %s206 = scalar_lea.smem [#allocation2], 0
          %207 = sst [smem:[%s206]] 0.0
          %v208 = vsel %vm201, 1, 0
          %v209 = vcvt.s32.f32 %v208
          %vm210 = vcmask 7168
          %v211 = vsel %vm210, %v209, 0.0
          %212 = vadd.xlane.f32.xlu0 %v211
          %v213 = vpop.xlane.xlu0 %212
          %v214 = vrot.slane %v213, 4
          %v215 = vadd.f32 %v213, %v214
          %v216 = vrot.slane %v215, 2
          %v217 = vadd.f32 %v215, %v216
          %v218 = vrot.slane %v217, 1
          %v219 = vadd.f32 %v217, %v218
          %s220 = vtos %v219
          %s221 = scalar_lea.smem [#allocation3], 0
          %222 = sst [smem:[%s221]] %s220
        $region32: #{tpu_custom_call.1} parent=27 // pred_fallthru
          _
        %s223 = sld [smem:[#allocation2]]
        %v224 = vsel %vm201, %v193, 0.0
        %vm225 = vcmask 7168
        %v226 = vsel %vm225, %v224, 0.0
        %227 = vadd.xlane.f32.xlu0 %v226
        %v228 = vpop.xlane.xlu0 %227
        %v229 = vrot.slane %v228, 4
        %v230 = vadd.f32 %v228, %v229
        %v231 = vrot.slane %v230, 2
        %v232 = vadd.f32 %v230, %v231
        %v233 = vrot.slane %v232, 1
        %v234 = vadd.f32 %v232, %v233
        %s235 = vtos %v234
        %s236 = sadd.f32 %s223, %s235
        %s237 = scalar_lea.smem [#allocation2], 0
        %238 = sst [smem:[%s237]] %s236
        // Predicated region
        $region33: #{tpu_custom_call.1} parent=27 // pred_check
          %p239 = pneg %p202
        $region34: #{tpu_custom_call.1} parent=27 // pred_check_branch
          %241 = sbr.rel (%p239) target = $region36
        $region35: #{tpu_custom_call.1} parent=27 // pred_region
          %vm242 = vcmp.eq.s32.totalorder %v184, 0
          %s243 = sld [smem:[#allocation2]]
          %vm244 = vcmp.eq.s32.totalorder %v184, 1
          %s245 = sld [smem:[#allocation3]]
          %v246 = vstv %s245
          %v247 = vsel %vm244, %v246, 0.0
          %v248 = vstv %s243
          %v249 = vsel %vm242, %v248, %v247
          %250 = vst [vmem:[%s166] sm:$0x1] %v249
        $region36: #{tpu_custom_call.1} parent=27 // pred_fallthru
          _
        %s251 = sand.u32 %s90, 1
        %s252 = scalar_lea.sflag [#allocation5], %s251
        %s253 = sand.u32 %s90, 1
        %s254 = scalar_lea.vmem [#allocation4], %s253
        // Predicated region
        $region37: #{tpu_custom_call.1} parent=27 // pred_check
          %p255 = pneg %p100
        $region38: #{tpu_custom_call.1} parent=27 // pred_check_branch
          %257 = sbr.rel (%p255) target = $region40
        $region39: #{tpu_custom_call.1} parent=27 // pred_region
          %s259 = ssub.s32 16, 16
          %260 = vsyncadd %s252, %s259
          %s261 = smul.addr %s20, 16
          %s262 = scalar_lea.hbm %s2, %s261
          %s264 = sshll.u32 %s254, 4
          %s265 = int_to_ptr.vmem [resolvable:$true] %s264
          %267 = dma.vmem_to_hbm [thread:$0]  %s265, 16, %s262, %s252
        $region40: #{tpu_custom_call.1} parent=27 // pred_fallthru
          _
      $region28: #{tpu_custom_call.1} parent=5 // pred_fallthru
        _
      %p268 = scmp.le.s32.totalorder 2, %s11
      // Predicated region
      $region41: #{tpu_custom_call.1} parent=5 // pred_check
        %p269 = pneg %p268
      $region42: #{tpu_custom_call.1} parent=5 // pred_check_branch
        %271 = sbr.rel (%p269) target = $region44
      $region43: #{tpu_custom_call.1} parent=5 // pred_region
        %s272 = ssub.s32 %s11, 2
        // Predicated region
        $region45: #{tpu_custom_call.1} parent=43 // pred_check
          %p273 = pneg %p106
        $region46: #{tpu_custom_call.1} parent=43 // pred_check_branch
          %275 = sbr.rel (%p273) target = $region48
        $region47: #{tpu_custom_call.1} parent=43 // pred_region
          %s276 = sand.u32 %s91, 1
          %s277 = scalar_lea.sflag [#allocation5], %s276
          %s278 = sand.u32 %s91, 1
          %s279 = scalar_lea.vmem [#allocation4], %s278
          %280 = dma.done %s277, 16
        $region48: #{tpu_custom_call.1} parent=43 // pred_fallthru
          _
      $region44: #{tpu_custom_call.1} parent=5 // pred_fallthru
        _
    $region6: #{tpu_custom_call.1} parent=1 // loop_footer
      %s15 = sadd.s32 1, %s11
    $region7: #{tpu_custom_call.1} parent=1 // loop_footer_branch
      %10 = sbr.rel target = $region3
    $region8: #{tpu_custom_call.1} parent=1 // loop_exit
      _
    %281 = vsyncpa [#allocation5], 1
    %s282 = scalar_lea.sflag [#allocation5], 1
    %283 = vsyncpa %s282, 1

</llo_original>
